<compile_context>
chip_gen: v5e
topology: v5e:2x2
jax: 0.10.0
libtpu: 0.0.40
codegen_flags: <defaults>
</compile_context>

<pallas_src>
import math

import jax
import jax.numpy as jnp
from jax.experimental import pallas as pl
from jax.experimental.pallas import tpu as pltpu


def _cast_kernel(x_ref, o_ref):
    # Pure elementwise cast-to-f32 copy (VPU path, HBM-bandwidth bound).
    o_ref[...] = x_ref[...].astype(jnp.float32)


_LANE_CANDIDATES = (4096, 2048, 1024, 512, 256, 128)

# Per-tile element budget. With a bf16 input (2 B) and f32 output (4 B), each
# double-buffered by the pipeline, VMEM per grid step ~= 2*(2+4)*TM*LANE
# = 12 B/elem -> 256K elems ~= 3 MiB. Fits the default scoped VMEM on every
# generation (v5e 16 MiB, v6e 32 MiB, v7x 32 MiB scoped / 64 MiB physical)
# while staying big enough (>=512 lanes) to run near the HBM roofline.
_TILE_ELEMS = 256 * 1024


def _cast_to_f32_2d(x2d):
    """(n, d) any-float -> (n, d) float32 via a tiled, pipelined Pallas copy."""
    n, d = x2d.shape
    total = n * d

    # Lane-dense re-layout: row-major reshape preserves bit order, so the
    # (rows, lane) slab is just a different view of the same flat buffer and
    # reshaping the result back reproduces the (n, d) view exactly.
    lane = next((c for c in _LANE_CANDIDATES if total % c == 0), None)

    if lane is None:
        # Ragged total (not a multiple of 128): fall back to a single
        # full-extent block, which is always a legal BlockSpec.
        return pl.pallas_call(
            _cast_kernel,
            out_shape=jax.ShapeDtypeStruct((n, d), jnp.float32),
            in_specs=[pl.BlockSpec((n, d), lambda: (0, 0))],
            out_specs=pl.BlockSpec((n, d), lambda: (0, 0)),
        )(x2d)

    rows = total // lane
    x_slab = x2d.reshape(rows, lane)

    # Tile the row axis: multiple of 8 sublanes, sized to ~_TILE_ELEMS elems.
    tm = max(8, (_TILE_ELEMS // lane) // 8 * 8)
    if tm >= rows:
        tm = rows  # single full-extent block (legal for any row count)

    out_slab = pl.pallas_call(
        _cast_kernel,
        out_shape=jax.ShapeDtypeStruct((rows, lane), jnp.float32),
        grid=(pl.cdiv(rows, tm),),
        in_specs=[pl.BlockSpec((tm, lane), lambda i: (i, 0))],
        out_specs=pl.BlockSpec((tm, lane), lambda i: (i, 0)),
        compiler_params=pltpu.CompilerParams(
            # Shards the copy across v7x's two TensorCores; harmless no-op on
            # single-TC v5e / v6e.
            dimension_semantics=("parallel",),
        ),
    )(x_slab)

    return out_slab.reshape(n, d)


def base_loss_forward(logit, target):
    """Pallas implementation of BaseLoss.forward.

    Args:
      logit:  (N, ...) array, any float dtype (e.g. bf16/f32).
      target: integer array with exactly N elements (e.g. (N,) or (N, 1, 1)).

    Returns:
      (logit_flat_f32, target_i32) matching PyTorch semantics
      (modulo int64 -> int32, see TODO at top of file).
    """
    n = logit.shape[0]
    d = math.prod(logit.shape[1:])

    # .view(n, -1): row-major flatten of the trailing dims.
    x2d = logit.reshape(n, d)
    logit_out = _cast_to_f32_2d(x2d)

    # .view(n): only legal when target has exactly n elements (same constraint
    # as PyTorch's .view(n)).
    assert math.prod(target.shape) == n, "target must have exactly n elements"
    target_out = target.reshape(n).astype(jnp.int32)

    return logit_out, target_out


if __name__ == "__main__":
    key = jax.random.PRNGKey(0)
    k1, k2, k3, k4, k5, k6 = jax.random.split(key, 6)

    # --- Spec shape (small, per the module) -------------------------------
    N, C, H, W = 2, 4, 16, 16
    num_classes = C  # BaseLoss(num_classes) stores it; forward doesn't use it.

    logit = jax.random.normal(k1, (N, C, H, W), dtype=jnp.bfloat16)
    target = jax.random.randint(k2, (N,), 0, num_classes, dtype=jnp.int32)

    logit_flat, target_flat = base_loss_forward(logit, target)
    jax.block_until_ready(logit_flat)
    jax.block_until_ready(target_flat)

    ref_logit = logit.reshape(N, -1).astype(jnp.float32)
    ref_target = target.reshape(N).astype(jnp.int32)
    assert logit_flat.shape == (N, C * H * W) and logit_flat.dtype == jnp.float32
    assert target_flat.shape == (N,) and target_flat.dtype == jnp.int32
    assert jnp.allclose(logit_flat, ref_logit)
    assert jnp.array_equal(target_flat, ref_target)

    # --- Larger shape: exercises the tiled, multi-step pipelined grid -----
    N2, C2, H2, W2 = 16, 8, 64, 64
    logit2 = jax.random.normal(k3, (N2, C2, H2, W2), dtype=jnp.bfloat16)
    target2 = jax.random.randint(k4, (N2, 1, 1), 0, C2, dtype=jnp.int32)
    l2, t2 = base_loss_forward(logit2, target2)
    jax.block_until_ready(l2)
    assert jnp.allclose(l2, logit2.reshape(N2, -1).astype(jnp.float32))
    assert jnp.array_equal(t2, target2.reshape(N2).astype(jnp.int32))

    # --- Ragged shape (total not a multiple of 128): fallback path --------
    N3, C3, H3, W3 = 3, 5, 7, 9
    logit3 = jax.random.normal(k5, (N3, C3, H3, W3), dtype=jnp.float32)
    target3 = jax.random.randint(k6, (N3,), 0, C3, dtype=jnp.int32)
    l3, t3 = base_loss_forward(logit3, target3)
    jax.block_until_ready(l3)
    assert jnp.allclose(l3, logit3.reshape(N3, -1).astype(jnp.float32))
    assert jnp.array_equal(t3, target3.reshape(N3).astype(jnp.int32))

    print("KERNEL_OK")
</pallas_src>

<mosaic_0001>
module attributes {stable_mosaic.version = 11 : i64} {
  func.func @_cast_kernel(%arg0: i32, %arg1: memref<1x2048xbf16, #tpu.memory_space<vmem>>, %arg2: memref<1x2048xf32, #tpu.memory_space<vmem>>) attributes {dimension_semantics = [#tpu.dimension_semantics<parallel>], iteration_bounds = array<i64: 1>, scalar_prefetch = 0 : i64, scratch_operands = 0 : i64, tpu.core_type = #tpu.core_type<tc>, window_params = [{transform_indices = @transform_0, window_bounds = array<i64: 1, 2048>}, {transform_indices = @transform_1, window_bounds = array<i64: 1, 2048>}]} {
    %c0 = arith.constant 0 : index
    %c0_0 = arith.constant 0 : index
    %0 = vector.load %arg1[%c0, %c0_0] : memref<1x2048xbf16, #tpu.memory_space<vmem>>, vector<1x2048xbf16>
    %1 = arith.extf %0 : vector<1x2048xbf16> to vector<1x2048xf32>
    %c0_1 = arith.constant 0 : index
    %c0_2 = arith.constant 0 : index
    %2 = vector.load %arg2[%c0_1, %c0_2] : memref<1x2048xf32, #tpu.memory_space<vmem>>, vector<1x2048xf32>
    tpu.vector_store %arg2[%c0_1, %c0_2], %1 {strides = array<i32>} : memref<1x2048xf32, #tpu.memory_space<vmem>>, vector<1x2048xf32>,
    return
  }
  func.func @transform_0(%arg0: i32) -> (i32, i32) {
    %c0_i32 = arith.constant 0 : i32
    %c0_i32_0 = arith.constant 0 : i32
    return %arg0, %c0_i32 : i32, i32
  }
  func.func @transform_1(%arg0: i32) -> (i32, i32) {
    %c0_i32 = arith.constant 0 : i32
    %c0_i32_0 = arith.constant 0 : i32
    return %arg0, %c0_i32 : i32, i32
  }
}

</mosaic_0001>

<llo_original>
// kernel: tpu_custom_call.1
$region0: #{tpu_custom_call.1}
  #allocation0 [shape = 'u32[]', space=smem, size = 0x4, offset = 0x4, fixed_abs, tag = 'smem constant byte address 0x4 - core index']
  #allocation1 [shape = 'u32[72,128]{1,0:T(1,128)}', space=vmem, size = 0x9000, scoped, tag = 'internal scratch']
  %s0 = inlined_call_operand.hbm [shape: bf16[1,2048], index: 0, kind: input, shape index: {}]
  %s1 = inlined_call_operand.hbm [shape: f32[1,2048], index: 1, kind: output, shape index: {}]
  %s2 = sld [smem:[#allocation0]]
  $region18: #{tpu_custom_call.1} parent=0
    _
  %s4 = ssub.s32 1, %s2
  %s5 = scalar_select 0, %s4, %s2
  $region1: #{tpu_custom_call.1} parent=0
    #allocation2 [shape = 'u8[8192]{0}', space=vmem, size = 0x2000, scoped, tag = 'input window, operand 0, single buffered']
    #allocation3 [shape = 's32[1]{0}', space=sflag, size = 0x4, scoped, tag = 'scoped memory for tpu_custom_call.1']
    #allocation4 [shape = 's32[1]{0}', space=sflag, size = 0x4, scoped, tag = 'scoped memory for tpu_custom_call.1']
    #allocation5 [shape = 'u8[8192]{0}', space=vmem, size = 0x2000, scoped, tag = 'output window, operand 0, single buffered']
    %6 = vsyncpa [#allocation3], 0
    %7 = vsyncpa [#allocation4], 0
    // Predicated region
    $region2: #{tpu_custom_call.1} parent=1 // pred_check
      _
    $region3: #{tpu_custom_call.1} parent=1 // pred_check_branch
      %9 = sbr.rel (0) target = $region5
    $region4: #{tpu_custom_call.1} parent=1 // pred_region
      %11 = vsyncadd [#allocation3], 0
      %s13 = sshll.u32 %s0, 4
      %s14 = int_to_ptr.hbm [resolvable:$true] %s13
      %s15 = sshll.u32 [#allocation2], 4
      %s16 = int_to_ptr.vmem [resolvable:$true] %s15
      %18 = dma.hbm_to_vmem [thread:$0]  %s14, 256, %s16, [#allocation3]
    $region5: #{tpu_custom_call.1} parent=1 // pred_fallthru
      _
    // Predicated region
    $region6: #{tpu_custom_call.1} parent=1 // pred_check
      _
    $region7: #{tpu_custom_call.1} parent=1 // pred_check_branch
      %20 = sbr.rel (0) target = $region9
    $region8: #{tpu_custom_call.1} parent=1 // pred_region
      %22 = dma.done [#allocation3], 256
    $region9: #{tpu_custom_call.1} parent=1 // pred_fallthru
      _
    %v23 = vld [vmem:[#allocation2] sm:$0xff]
    %v24 = vld [vmem:[#allocation2 + $0x8] sm:$0xff]
    %v25 = vunpack.c.l.bf16 %v23
    %v26 = vunpack.c.h.bf16 %v23
    %v27 = vunpack.c.l.bf16 %v24
    %v28 = vunpack.c.h.bf16 %v24
    %v33 = vrot.slane %v25, 1
    %v34 = vrot.slane %v25, 2
    %v35 = vrot.slane %v25, 3
    %v36 = vrot.slane %v26, 4
    %v37 = vrot.slane %v26, 5
    %v38 = vrot.slane %v26, 6
    %v39 = vrot.slane %v26, 7
    %v40 = vrot.slane %v27, 1
    %v41 = vrot.slane %v27, 2
    %v42 = vrot.slane %v27, 3
    %v43 = vrot.slane %v28, 4
    %v44 = vrot.slane %v28, 5
    %v45 = vrot.slane %v28, 6
    %v46 = vrot.slane %v28, 7
    %vm47 = vcmask 1040384
    %v48 = vsel %vm47, %v25, %v33
    %vm49 = vcmask 1042434
    %v50 = vsel %vm49, %v34, %v35
    %vm51 = vcmask 1041408
    %v52 = vsel %vm51, %v48, %v50
    %vm53 = vcmask 1044484
    %v54 = vsel %vm53, %v36, %v37
    %vm55 = vcmask 1046534
    %v56 = vsel %vm55, %v38, %v39
    %vm57 = vcmask 1045508
    %v58 = vsel %vm57, %v54, %v56
    %vm59 = vcmask 1043456
    %v60 = vsel %vm59, %v52, %v58
    %v61 = vsel %vm47, %v27, %v40
    %v62 = vsel %vm49, %v41, %v42
    %v63 = vsel %vm51, %v61, %v62
    %v64 = vsel %vm53, %v43, %v44
    %v65 = vsel %vm55, %v45, %v46
    %v66 = vsel %vm57, %v64, %v65
    %v67 = vsel %vm59, %v63, %v66
    %70 = vst [vmem:[#allocation5] sm:$0xff] %v60
    %71 = vst [vmem:[#allocation5 + $0x8] sm:$0xff] %v67
    // Predicated region
    $region10: #{tpu_custom_call.1} parent=1 // pred_check
      _
    $region11: #{tpu_custom_call.1} parent=1 // pred_check_branch
      %73 = sbr.rel (0) target = $region13
    $region12: #{tpu_custom_call.1} parent=1 // pred_region
      %75 = vsyncadd [#allocation4], 0
      %s77 = sshll.u32 [#allocation5], 4
      %s78 = int_to_ptr.vmem [resolvable:$true] %s77
      %s79 = sshll.u32 %s1, 4
      %s80 = int_to_ptr.hbm [resolvable:$true] %s79
      %82 = dma.vmem_to_hbm [thread:$0]  %s78, 256, %s80, [#allocation4]
    $region13: #{tpu_custom_call.1} parent=1 // pred_fallthru
      _
    // Predicated region
    $region14: #{tpu_custom_call.1} parent=1 // pred_check
      _
    $region15: #{tpu_custom_call.1} parent=1 // pred_check_branch
      %84 = sbr.rel (0) target = $region17
    $region16: #{tpu_custom_call.1} parent=1 // pred_region
      %86 = dma.done [#allocation4], 256
    $region17: #{tpu_custom_call.1} parent=1 // pred_fallthru
      _
    %87 = vsyncpa [#allocation3], 1
    %88 = vsyncpa [#allocation4], 1

</llo_original>
